<compile_context>
chip_gen: v6e
topology: v6e:2x2x1
jax: 0.10.0
libtpu: 0.0.40
codegen_flags: <defaults>
</compile_context>

<pallas_src>
import functools

import jax
import jax.numpy as jnp
from jax import lax
from jax.experimental import pallas as pl
from jax.experimental.pallas import tpu as pltpu


def _pann_chunk_kernel(x0_ref, u_ref, bigm_ref, apow_ref, out_ref, state_ref):
    """One grid step = one chunk of TT time steps (blocked linear scan).

    x0_ref:    (bb, S)             initial state for this batch shard
    u_ref:     (bb, TT*ID)         flattened raw input chunk
    bigm_ref:  (TT*ID, TT*S)  f32  causal block-Toeplitz combine (incl. B^T)
    apow_ref:  (S, TT*S)      f32  [ (A^T)^1 | (A^T)^2 | ... | (A^T)^TT ]
    out_ref:   (bb, TT*S)          chunk outputs, batch-major, lane-dense
    state_ref: (bb, S)        f32  carried state across time chunks
    """
    s_dim = x0_ref.shape[-1]
    width = out_ref.shape[-1]

    # First chunk of a batch shard: (re)initialize the carried state.
    @pl.when(pl.program_id(1) == 0)
    def _():
        state_ref[...] = x0_ref[...].astype(jnp.float32)

    # Parallel part: causal intra-chunk combination.  One big MXU GEMM that
    # also performs the u @ B^T projection (no HBM-resident v tensor).
    comb = jnp.dot(u_ref[...].astype(jnp.float32), bigm_ref[...],
                   preferred_element_type=jnp.float32)            # (bb, TT*S)

    # Serial part: propagate the carried state through all TT steps of the
    # chunk with a single tiny GEMM against the stacked powers of A^T.
    prop = jnp.dot(state_ref[...], apow_ref[...],
                   preferred_element_type=jnp.float32)            # (bb, TT*S)

    out = prop + comb
    out_ref[...] = out.astype(out_ref.dtype)
    # Carried state = state after the last step of this chunk (kept in f32).
    state_ref[...] = out[:, width - s_dim:]


def _default_batch_shards(batch):
    # v7x has 2 TensorCores per chip -> shard the independent batch axis
    # across them.  Single-TC chips (v5e/v6e): extra shards only serialize, so
    # keep 1.  The per-shard batch must stay a multiple of 8 (sublane tiling).
    try:
        kind = jax.devices()[0].device_kind.lower()
    except Exception:
        return 1
    if "v7" in kind and batch % 16 == 0:
        return 2
    return 1


def pann_forward(inputs, x, A, B, *, time_chunk=32, batch_shards=None):
    """
    inputs: (batch, T, input_dim)
    x:      (batch, S, state_dim)   -- only x[:, 0] is used (matches torch code)
    A:      (state_dim, state_dim)
    B:      (state_dim, input_dim)
    returns (batch, T, state_dim)
    """
    batch, T, input_dim = inputs.shape
    state_dim = A.shape[0]
    assert A.shape == (state_dim, state_dim)
    assert B.shape == (state_dim, input_dim)
    assert T % time_chunk == 0, "T must be a multiple of time_chunk"

    TT = time_chunk
    nc = T // TT
    f32 = jnp.float32
    hi = jax.lax.Precision.HIGHEST

    if batch_shards is None:
        batch_shards = _default_batch_shards(batch)
    assert batch % batch_shards == 0
    bb = batch // batch_shards
    assert bb == batch or bb % 8 == 0, "per-shard batch must be a multiple of 8"
    # Lane/sublane tiling of the flattened chunk blocks.
    assert nc == 1 or (TT * input_dim) % 128 == 0, "time_chunk*input_dim % 128"
    assert nc == 1 or (TT * state_dim) % 128 == 0, "time_chunk*state_dim % 128"

    # ---- Wrapper-side precompute (tiny, O(TT^2 * ID * S) for bigm) ----------
    A_T = A.astype(f32).T                                   # (S, S)
    B_T = B.astype(f32).T                                   # (ID, S)
    eye = jnp.eye(state_dim, dtype=f32)

    def _next_pow(carry, _):
        nxt = jnp.dot(carry, A_T, precision=hi)
        return nxt, nxt

    _, pows_1 = lax.scan(_next_pow, eye, None, length=TT)   # (A^T)^1..(A^T)^TT
    pows_0 = jnp.concatenate([eye[None], pows_1[:-1]], 0)   # (A^T)^0..(A^T)^{TT-1}

    # Carried-state propagation: column block j holds (A^T)^{j+1}.
    apow_cat = jnp.transpose(pows_1, (1, 0, 2)).reshape(state_dim, TT * state_dim)

    # Causal block-Toeplitz combination matrix (absorbs the B projection):
    #   bigm[k*ID + i, j*S + s] = (B^T @ (A^T)^{j-k})[i, s]   for k <= j, else 0
    bt_apow = jnp.einsum("is,msj->mij", B_T, pows_0, precision=hi)  # (TT, ID, S)
    k_idx = jnp.arange(TT)[:, None]
    j_idx = jnp.arange(TT)[None, :]
    delta = j_idx - k_idx
    mask = delta >= 0
    blocks = jnp.where(mask[:, :, None, None],
                       bt_apow[jnp.where(mask, delta, 0)], 0.0)     # (TT,TT,ID,S)
    bigm = jnp.transpose(blocks, (0, 2, 1, 3)).reshape(TT * input_dim,
                                                       TT * state_dim)

    # ---- Kernel launch ------------------------------------------------------
    u_flat = inputs.reshape(batch, T * input_dim)   # free contiguous reshape
    x0 = x[:, 0].astype(f32)                        # (batch, state_dim)
    out_dtype = inputs.dtype

    out_flat = pl.pallas_call(
        _pann_chunk_kernel,
        out_shape=jax.ShapeDtypeStruct((batch, T * state_dim), out_dtype),
        grid_spec=pltpu.PrefetchScalarGridSpec(
            num_scalar_prefetch=0,
            grid=(batch_shards, nc),                # time chunks innermost
            in_specs=[
                pl.BlockSpec((bb, state_dim), lambda b, c: (b, 0)),          # x0
                pl.BlockSpec((bb, TT * input_dim), lambda b, c: (b, c)),     # u chunk
                pl.BlockSpec((TT * input_dim, TT * state_dim),
                             lambda b, c: (0, 0)),                           # bigm (invariant)
                pl.BlockSpec((state_dim, TT * state_dim),
                             lambda b, c: (0, 0)),                           # A^T powers (invariant)
            ],
            out_specs=pl.BlockSpec((bb, TT * state_dim), lambda b, c: (b, c)),
            scratch_shapes=[pltpu.VMEM((bb, state_dim), f32)],
        ),
        compiler_params=pltpu.CompilerParams(
            # batch shards independent -> "parallel" (v7x megacore);
            # recurrence over time chunks must stay sequential -> "arbitrary".
            dimension_semantics=("parallel", "arbitrary"),
            # Above v5e's 16 MiB default scoped limit, below v7x's 64 MiB VMEM.
            vmem_limit_bytes=48 * 1024 * 1024,
        ),
    )(x0, u_flat, bigm, apow_cat)

    # Free contiguous reshape back to the PyTorch-facing layout.
    return out_flat.reshape(batch, T, state_dim)


def pann_reference(inputs, x, A, B):
    """Pure-JAX reference mirroring the PyTorch loop (true-f32 matmuls)."""
    hi = jax.lax.Precision.HIGHEST

    def step(state, u_t):
        nxt = jnp.dot(state, A.T, precision=hi) + jnp.dot(u_t, B.T, precision=hi)
        return nxt, nxt

    _, ys = lax.scan(step, x[:, 0].astype(jnp.float32),
                     jnp.transpose(inputs, (1, 0, 2)).astype(jnp.float32))
    return jnp.transpose(ys, (1, 0, 2))


if __name__ == "__main__":
    key = jax.random.PRNGKey(0)
    k1, k2, k3, k4 = jax.random.split(key, 4)

    batch, T, input_dim, state_dim = 8, 256, 8, 8

    inputs = jax.random.normal(k1, (batch, T, input_dim), dtype=jnp.float32)
    x_init = jax.random.normal(k2, (batch, 1, state_dim), dtype=jnp.float32)

    # Deterministic, stable "physics" parameters (spectral radius < 1).
    A = 0.9 * jnp.eye(state_dim, dtype=jnp.float32) \
        + (0.05 / jnp.sqrt(state_dim)) \
        * jax.random.normal(k3, (state_dim, state_dim), dtype=jnp.float32)
    B = 0.1 * jax.random.normal(k4, (state_dim, input_dim), dtype=jnp.float32)

    fwd = jax.jit(functools.partial(pann_forward, time_chunk=32))
    out = jax.block_until_ready(fwd(inputs, x_init, A, B))

    ref = pann_reference(inputs, x_init, A, B)
    assert out.shape == (batch, T, state_dim)
    assert jnp.allclose(out, ref, atol=2e-3, rtol=2e-3), "mismatch vs reference"

    print("KERNEL_OK")
</pallas_src>

<mosaic_0001>
module attributes {stable_mosaic.version = 11 : i64} {
  func.func @_pann_chunk_kernel(%arg0: i32, %arg1: i32, %arg2: memref<8x8xf32, #tpu.memory_space<vmem>>, %arg3: memref<8x256xf32, #tpu.memory_space<vmem>>, %arg4: memref<256x256xf32, #tpu.memory_space<vmem>>, %arg5: memref<8x256xf32, #tpu.memory_space<vmem>>, %arg6: memref<8x256xf32, #tpu.memory_space<vmem>>, %arg7: memref<8x8xf32, #tpu.memory_space<vmem>>) attributes {dimension_semantics = [#tpu.dimension_semantics<parallel>, #tpu.dimension_semantics<arbitrary>], iteration_bounds = array<i64: 1, 8>, scalar_prefetch = 0 : i64, scratch_operands = 1 : i64, tpu.core_type = #tpu.core_type<tc>, window_params = [{transform_indices = @transform_0, window_bounds = array<i64: 8, 8>}, {transform_indices = @transform_1, window_bounds = array<i64: 8, 256>}, {pipeline_mode = #tpu.pipeline_mode<synchronous>, transform_indices = @transform_2, window_bounds = array<i64: 256, 256>}, {pipeline_mode = #tpu.pipeline_mode<synchronous>, transform_indices = @transform_3, window_bounds = array<i64: 8, 256>}, {transform_indices = @transform_4, window_bounds = array<i64: 8, 256>}]} {
    %c0_i32 = arith.constant 0 : i32
    %0 = arith.cmpi eq, %arg1, %c0_i32 : i32
    %1 = arith.extui %0 : i1 to i32
    %c0_i32_0 = arith.constant 0 : i32
    %2 = arith.cmpi ne, %1, %c0_i32_0 : i32
    scf.if %2 {
      %c0_13 = arith.constant 0 : index
      %c0_14 = arith.constant 0 : index
      %13 = vector.load %arg2[%c0_13, %c0_14] : memref<8x8xf32, #tpu.memory_space<vmem>>, vector<8x8xf32>
      %c0_15 = arith.constant 0 : index
      %c0_16 = arith.constant 0 : index
      %14 = vector.load %arg7[%c0_15, %c0_16] : memref<8x8xf32, #tpu.memory_space<vmem>>, vector<8x8xf32>
      tpu.vector_store %arg7[%c0_15, %c0_16], %13 {strides = array<i32>} : memref<8x8xf32, #tpu.memory_space<vmem>>, vector<8x8xf32>,
    } else {
    }
    %c0 = arith.constant 0 : index
    %c0_1 = arith.constant 0 : index
    %3 = vector.load %arg3[%c0, %c0_1] : memref<8x256xf32, #tpu.memory_space<vmem>>, vector<8x256xf32>
    %c0_2 = arith.constant 0 : index
    %c0_3 = arith.constant 0 : index
    %4 = vector.load %arg4[%c0_2, %c0_3] : memref<256x256xf32, #tpu.memory_space<vmem>>, vector<256x256xf32>
    %cst = arith.constant dense<0.000000e+00> : vector<8x256xf32>
    %5 = tpu.matmul %3, %4, %cst {dimension_numbers = #tpu.dot_dimension_numbers<[1], [0], [0], [1], [0, 0, 1, 1], [], []>} : vector<8x256xf32>, vector<256x256xf32>, vector<8x256xf32> -> vector<8x256xf32>
    %c0_4 = arith.constant 0 : index
    %c0_5 = arith.constant 0 : index
    %6 = vector.load %arg7[%c0_4, %c0_5] : memref<8x8xf32, #tpu.memory_space<vmem>>, vector<8x8xf32>
    %c0_6 = arith.constant 0 : index
    %c0_7 = arith.constant 0 : index
    %7 = vector.load %arg5[%c0_6, %c0_7] : memref<8x256xf32, #tpu.memory_space<vmem>>, vector<8x256xf32>
    %cst_8 = arith.constant dense<0.000000e+00> : vector<8x256xf32>
    %8 = tpu.matmul %6, %7, %cst_8 {dimension_numbers = #tpu.dot_dimension_numbers<[1], [0], [0], [1], [0, 0, 1, 1], [], []>} : vector<8x8xf32>, vector<8x256xf32>, vector<8x256xf32> -> vector<8x256xf32>
    %9 = arith.addf %8, %5 : vector<8x256xf32>
    %c0_9 = arith.constant 0 : index
    %c0_10 = arith.constant 0 : index
    %10 = vector.load %arg6[%c0_9, %c0_10] : memref<8x256xf32, #tpu.memory_space<vmem>>, vector<8x256xf32>
    tpu.vector_store %arg6[%c0_9, %c0_10], %9 {strides = array<i32>} : memref<8x256xf32, #tpu.memory_space<vmem>>, vector<8x256xf32>,
    %11 = vector.extract_strided_slice %9 {offsets = [0, 248], sizes = [8, 8], strides = [1, 1]} : vector<8x256xf32> to vector<8x8xf32>
    %c0_11 = arith.constant 0 : index
    %c0_12 = arith.constant 0 : index
    %12 = vector.load %arg7[%c0_11, %c0_12] : memref<8x8xf32, #tpu.memory_space<vmem>>, vector<8x8xf32>
    tpu.vector_store %arg7[%c0_11, %c0_12], %11 {strides = array<i32>} : memref<8x8xf32, #tpu.memory_space<vmem>>, vector<8x8xf32>,
    return
  }
  func.func @transform_0(%arg0: i32, %arg1: i32) -> (i32, i32) {
    %c0_i32 = arith.constant 0 : i32
    %c0_i32_0 = arith.constant 0 : i32
    return %arg0, %c0_i32 : i32, i32
  }
  func.func @transform_1(%arg0: i32, %arg1: i32) -> (i32, i32) {
    %c0_i32 = arith.constant 0 : i32
    return %arg0, %arg1 : i32, i32
  }
  func.func @transform_2(%arg0: i32, %arg1: i32) -> (i32, i32) {
    %c0_i32 = arith.constant 0 : i32
    %c0_i32_0 = arith.constant 0 : i32
    %c0_i32_1 = arith.constant 0 : i32
    return %c0_i32, %c0_i32_0 : i32, i32
  }
  func.func @transform_3(%arg0: i32, %arg1: i32) -> (i32, i32) {
    %c0_i32 = arith.constant 0 : i32
    %c0_i32_0 = arith.constant 0 : i32
    %c0_i32_1 = arith.constant 0 : i32
    return %c0_i32, %c0_i32_0 : i32, i32
  }
  func.func @transform_4(%arg0: i32, %arg1: i32) -> (i32, i32) {
    %c0_i32 = arith.constant 0 : i32
    return %arg0, %arg1 : i32, i32
  }
}

</mosaic_0001>

<llo_original>
// kernel: custom-call.2
$region0: #{custom-call.2}
  %s0 = inlined_call_operand.vmem [shape: f32[32,8,8], index: 0, kind: output, shape index: {}]

// kernel: pann_forward.1
$region0: #{pann_forward.1}
  #allocation0 [shape = 'u32[]', space=smem, size = 0x4, offset = 0x4, fixed_abs, tag = 'smem constant byte address 0x4 - core index']
  #allocation1 [shape = 'u32[144,128]{1,0:T(1,128)}', space=vmem, size = 0x12000, scoped, tag = 'internal scratch']
  #allocation2 [shape = 'f32[8,8]{1,0:T(8,128)}', space=vmem, size = 0x1000, scoped, tag = 'scratch operand']
  %s0 = inlined_call_operand.vmem [shape: f32[8,8], index: 0, kind: input, shape index: {}]
  %s1 = inlined_call_operand.vmem [shape: f32[8,2048], index: 1, kind: input, shape index: {}]
  %s2 = inlined_call_operand.vmem [shape: f32[256,256], index: 2, kind: input, shape index: {}]
  %s3 = inlined_call_operand.vmem [shape: f32[8,256], index: 3, kind: input, shape index: {}]
  %s4 = inlined_call_operand.vmem [shape: f32[8,2048], index: 4, kind: output, shape index: {}]
  %s5 = sld [smem:[#allocation0]]
  $region53: #{pann_forward.1} parent=0
    _
  %s7 = ssub.s32 1, %s5
  %s8 = scalar_select 0, %s7, %s5
  loop: start=0, step=1, limit=10
  $region2: #{pann_forward.1} parent=0 // loop_pre_header
    _
  $region3: #{pann_forward.1} parent=0 // loop_header
    %s10 = sphi 0, %s14
    %p11 = scmp.ge.s32.totalorder %s10, 10
    %s17 = sphi 0, %s29
    %s18 = sphi 0, %s25
    %s19 = sphi 0, %s17
    %s20 = sphi 0, %s18
    %s21 = sphi 0, %s19
    %s22 = sphi 0, %s20
    %s32 = sphi 0, %s34
    %s35 = sphi 0, %s32
    %s36 = sphi 0, %s35
    %s52 = sphi 0, %s36
    %s60 = sphi 0, %s62
    %s63 = sphi 0, %s60
    %s64 = sphi 0, %s63
    %s80 = sphi 0, %s64
    %s84 = sphi 0, %s84
    %s86 = sphi 0, %s84
    %s87 = sphi 0, %s86
    %s101 = sphi 0, %s87
    %s105 = sphi 0, %s105
    %s107 = sphi 0, %s105
    %s108 = sphi 0, %s107
    %s122 = sphi 0, %s108
    %s130 = sphi 0, %s132
    %s133 = sphi 0, %s130
    %s134 = sphi 0, %s133
    %s150 = sphi 0, %s134
  $region4: #{pann_forward.1} parent=0 // loop_header_branch
    %13 = sbr.rel (%p11) target = $region8
  $region5: #{pann_forward.1} parent=0 // loop_body
    %s15 = ssub.s32 %s10, 1
    %s16 = ssub.s32 %s10, 2
    %s23 = sadd.s32 1, %s18
    %p24 = scmp.ge.s32.totalorder %s23, 8
    %s25 = scalar_select %p24, 0, %s23
    %s26 = sadd.s32 1, %s17
    %s27 = scalar_select %p24, %s26, %s17
    %p28 = scmp.ge.s32.totalorder %s27, 1
    %s29 = scalar_select %p28, 0, %s27
    %s30 = ssub.s32 %s17, %s29
    %p31 = scmp.eq.s32.totalorder %s30, 0
    %s33 = sadd.s32 %s32, 1
    %s34 = scalar_select %p31, %s32, %s33
    %p37 = pneg %p31
    %p38 = scmp.eq.s32.totalorder %s10, 7
    %p39 = por %p37, %p38
    %p40 = scmp.ne.s32.totalorder %s32, %s35
    %p41 = scmp.eq.s32.totalorder %s10, 0
    %p42 = por %p40, %p41
    %p43 = scmp.ne.s32.totalorder %s32, %s35
    %p44 = scmp.eq.s32.totalorder %s15, 7
    %p45 = por %p43, %p44
    %p46 = scmp.ne.s32.totalorder %s35, %s36
    %p47 = scmp.eq.s32.totalorder %s15, 0
    %p48 = por %p46, %p47
    %p49 = scmp.ne.s32.totalorder %s35, %s36
    %p50 = scmp.eq.s32.totalorder %s16, 7
    %p51 = por %p49, %p50
    %p53 = scmp.ne.s32.totalorder %s36, %s52
    %p54 = scmp.eq.s32.totalorder %s16, 0
    %p55 = por %p53, %p54
    %s56 = ssub.s32 %s17, %s29
    %s57 = ssub.s32 %s18, %s25
    %s58 = sor.u32 %s56, %s57
    %p59 = scmp.eq.s32.totalorder %s58, 0
    %s61 = sadd.s32 %s60, 1
    %s62 = scalar_select %p59, %s60, %s61
    %p65 = pneg %p59
    %p66 = scmp.eq.s32.totalorder %s10, 7
    %p67 = por %p65, %p66
    %p68 = scmp.ne.s32.totalorder %s60, %s63
    %p69 = scmp.eq.s32.totalorder %s10, 0
    %p70 = por %p68, %p69
    %p71 = scmp.ne.s32.totalorder %s60, %s63
    %p72 = scmp.eq.s32.totalorder %s15, 7
    %p73 = por %p71, %p72
    %p74 = scmp.ne.s32.totalorder %s63, %s64
    %p75 = scmp.eq.s32.totalorder %s15, 0
    %p76 = por %p74, %p75
    %p77 = scmp.ne.s32.totalorder %s63, %s64
    %p78 = scmp.eq.s32.totalorder %s16, 7
    %p79 = por %p77, %p78
    %p81 = scmp.ne.s32.totalorder %s64, %s80
    %p82 = scmp.eq.s32.totalorder %s16, 0
    %p83 = por %p81, %p82
    %s85 = sadd.s32 %s84, 1
    %p88 = scmp.eq.s32.totalorder %s10, 7
    %p89 = scmp.ne.s32.totalorder %s84, %s86
    %p90 = scmp.eq.s32.totalorder %s10, 0
    %p91 = por %p89, %p90
    %p92 = scmp.ne.s32.totalorder %s84, %s86
    %p93 = scmp.eq.s32.totalorder %s15, 7
    %p94 = por %p92, %p93
    %p95 = scmp.ne.s32.totalorder %s86, %s87
    %p96 = scmp.eq.s32.totalorder %s15, 0
    %p97 = por %p95, %p96
    %p98 = scmp.ne.s32.totalorder %s86, %s87
    %p99 = scmp.eq.s32.totalorder %s16, 7
    %p100 = por %p98, %p99
    %p102 = scmp.ne.s32.totalorder %s87, %s101
    %p103 = scmp.eq.s32.totalorder %s16, 0
    %p104 = por %p102, %p103
    %s106 = sadd.s32 %s105, 1
    %p109 = scmp.eq.s32.totalorder %s10, 7
    %p110 = scmp.ne.s32.totalorder %s105, %s107
    %p111 = scmp.eq.s32.totalorder %s10, 0
    %p112 = por %p110, %p111
    %p113 = scmp.ne.s32.totalorder %s105, %s107
    %p114 = scmp.eq.s32.totalorder %s15, 7
    %p115 = por %p113, %p114
    %p116 = scmp.ne.s32.totalorder %s107, %s108
    %p117 = scmp.eq.s32.totalorder %s15, 0
    %p118 = por %p116, %p117
    %p119 = scmp.ne.s32.totalorder %s107, %s108
    %p120 = scmp.eq.s32.totalorder %s16, 7
    %p121 = por %p119, %p120
    %p123 = scmp.ne.s32.totalorder %s108, %s122
    %p124 = scmp.eq.s32.totalorder %s16, 0
    %p125 = por %p123, %p124
    %s126 = ssub.s32 %s17, %s29
    %s127 = ssub.s32 %s18, %s25
    %s128 = sor.u32 %s126, %s127
    %p129 = scmp.eq.s32.totalorder %s128, 0
    %s131 = sadd.s32 %s130, 1
    %s132 = scalar_select %p129, %s130, %s131
    %p135 = pneg %p129
    %p136 = scmp.eq.s32.totalorder %s10, 7
    %p137 = por %p135, %p136
    %p138 = scmp.ne.s32.totalorder %s130, %s133
    %p139 = scmp.eq.s32.totalorder %s10, 0
    %p140 = por %p138, %p139
    %p141 = scmp.ne.s32.totalorder %s130, %s133
    %p142 = scmp.eq.s32.totalorder %s15, 7
    %p143 = por %p141, %p142
    %p144 = scmp.ne.s32.totalorder %s133, %s134
    %p145 = scmp.eq.s32.totalorder %s15, 0
    %p146 = por %p144, %p145
    %p147 = scmp.ne.s32.totalorder %s133, %s134
    %p148 = scmp.eq.s32.totalorder %s16, 7
    %p149 = por %p147, %p148
    %p151 = scmp.ne.s32.totalorder %s134, %s150
    %p152 = scmp.eq.s32.totalorder %s16, 0
    %p153 = por %p151, %p152
    %p154 = scmp.le.s32.totalorder 1, %s10
    %p155 = scmp.lt.s32.totalorder %s10, 9
    %p156 = pnand %p154, %p155
    %p157 = pneg %p156
    // Predicated region
    $region9: #{pann_forward.1} parent=5 // pred_check
      _
    $region10: #{pann_forward.1} parent=5 // pred_check_branch
      %159 = sbr.rel (%p156) target = $region12
    $region11: #{pann_forward.1} parent=5 // pred_region
      %s160 = ssub.s32 %s10, 1
      // Predicated region
      $region13: #{pann_forward.1} parent=11 // pred_check
        %p161 = pneg %p48
      $region14: #{pann_forward.1} parent=11 // pred_check_branch
        %163 = sbr.rel (%p161) target = $region16
      $region15: #{pann_forward.1} parent=11 // pred_region
        %p164 = scmp.lt.s32.totalorder %s19, 0
        %s165 = scalar_select %p164, %s19, 0
        %s166 = smul.addr %s165, 8
        %s167 = scalar_lea.vmem %s0, %s166
      $region16: #{pann_forward.1} parent=11 // pred_fallthru
        _
      // Predicated region
      $region17: #{pann_forward.1} parent=11 // pred_check
        %p168 = pneg %p97
      $region18: #{pann_forward.1} parent=11 // pred_check_branch
        %170 = sbr.rel (%p168) target = $region20
      $region19: #{pann_forward.1} parent=11 // pred_region
        _
      $region20: #{pann_forward.1} parent=11 // pred_fallthru
        _
      // Predicated region
      $region21: #{pann_forward.1} parent=11 // pred_check
        %p171 = pneg %p118
      $region22: #{pann_forward.1} parent=11 // pred_check_branch
        %173 = sbr.rel (%p171) target = $region24
      $region23: #{pann_forward.1} parent=11 // pred_region
        _
      $region24: #{pann_forward.1} parent=11 // pred_fallthru
        _
    $region12: #{pann_forward.1} parent=5 // pred_fallthru
      _
    %p174 = scmp.lt.s32.totalorder %s10, 8
    // Predicated region
    $region25: #{pann_forward.1} parent=5 // pred_check
      %p175 = pneg %p174
    $region26: #{pann_forward.1} parent=5 // pred_check_branch
      %177 = sbr.rel (%p175) target = $region28
    $region27: #{pann_forward.1} parent=5 // pred_region
      // Predicated region
      $region29: #{pann_forward.1} parent=27 // pred_check
        %p178 = pneg %p70
      $region30: #{pann_forward.1} parent=27 // pred_check_branch
        %180 = sbr.rel (%p178) target = $region32
      $region31: #{pann_forward.1} parent=27 // pred_region
        %s181 = smul.u32 2, %s18
        %p182 = scmp.lt.s32.totalorder %s17, 0
        %s183 = scalar_select %p182, %s17, 0
        %p184 = scmp.lt.s32.totalorder %s181, 15
        %s185 = scalar_select %p184, %s181, 15
        %s186 = smul.addr %s183, 16
        %s187 = sadd.s32 %s185, %s186
        %s188 = smul.addr %s187, 8
        %s189 = scalar_lea.vmem %s1, %s188
        %s190 = smul.u32 2, %s18
      $region32: #{pann_forward.1} parent=27 // pred_fallthru
        _
    $region28: #{pann_forward.1} parent=5 // pred_fallthru
      _
    %p191 = scmp.le.s32.totalorder 1, %s10
    %p192 = scmp.lt.s32.totalorder %s10, 9
    %p193 = pnand %p191, %p192
    %p194 = pneg %p193
    // Predicated region
    $region33: #{pann_forward.1} parent=5 // pred_check
      _
    $region34: #{pann_forward.1} parent=5 // pred_check_branch
      %196 = sbr.rel (%p193) target = $region36
    $region35: #{pann_forward.1} parent=5 // pred_region
      %s197 = ssub.s32 %s10, 1
      %p198 = scmp.lt.s32.totalorder %s19, 0
      %s199 = scalar_select %p198, %s19, 0
      %s200 = smul.addr %s199, 8
      %s201 = scalar_lea.vmem %s0, %s200
      %p202 = pneg %p48
      %p203 = pneg %p45
      %s204 = smul.u32 2, %s20
      %p205 = scmp.lt.s32.totalorder %s19, 0
      %s206 = scalar_select %p205, %s19, 0
      %p207 = scmp.lt.s32.totalorder %s204, 15
      %s208 = scalar_select %p207, %s204, 15
      %s209 = smul.addr %s206, 16
      %s210 = sadd.s32 %s208, %s209
      %s211 = smul.addr %s210, 8
      %s212 = scalar_lea.vmem %s1, %s211
      %p213 = pneg %p76
      %p214 = pneg %p73
      %p215 = pneg %p97
      %p216 = pneg %p94
      %p217 = pneg %p118
      %p218 = pneg %p115
      %p219 = pneg %p146
      %p220 = pneg %p143
      %s221 = smul.u32 2, %s20
      %p222 = scmp.lt.s32.totalorder %s19, 0
      %s223 = scalar_select %p222, %s19, 0
      %p224 = scmp.lt.s32.totalorder %s221, 15
      %s225 = scalar_select %p224, %s221, 15
      %s226 = smul.addr %s223, 16
      %s227 = sadd.s32 %s225, %s226
      %s228 = smul.addr %s227, 8
      %s229 = scalar_lea.vmem %s4, %s228
      %p230 = scmp.lt.s32.totalorder %s19, 0
      %s231 = scalar_select %p230, %s19, 0
      %s232 = smul.addr %s231, 8
      %s233 = scalar_lea.vmem %s0, %s232
      %s234 = smul.u32 2, %s20
      %p235 = scmp.lt.s32.totalorder %s19, 0
      %s236 = scalar_select %p235, %s19, 0
      %p237 = scmp.lt.s32.totalorder %s234, 15
      %s238 = scalar_select %p237, %s234, 15
      %s239 = smul.addr %s236, 16
      %s240 = sadd.s32 %s238, %s239
      %s241 = smul.addr %s240, 8
      %s242 = scalar_lea.vmem %s1, %s241
      %s243 = smul.u32 2, %s20
      %s244 = smul.u32 2, %s20
      %p245 = scmp.lt.s32.totalorder %s19, 0
      %s246 = scalar_select %p245, %s19, 0
      %p247 = scmp.lt.s32.totalorder %s244, 15
      %s248 = scalar_select %p247, %s244, 15
      %s249 = smul.addr %s246, 16
      %s250 = sadd.s32 %s248, %s249
      %s251 = smul.addr %s250, 8
      %s252 = scalar_lea.vmem %s4, %s251
      %s253 = smul.u32 2, %s20
      %p254 = scmp.eq.s32.totalorder %s20, 0
      // Predicated region
      $region37: #{pann_forward.1} parent=35 // pred_check
        %p255 = pneg %p254
      $region38: #{pann_forward.1} parent=35 // pred_check_branch
        %257 = sbr.rel (%p255) target = $region40
      $region39: #{pann_forward.1} parent=35 // pred_region
        %v258 = vld [vmem:[%s233] sm:$0xff]
        %vm259 = vcmask 64512
        %260 = vst.msk [vmem:[#allocation2] sm:$0xff] %vm259, %v258
      $region40: #{pann_forward.1} parent=35 // pred_fallthru
        _
      %v261 = vld [vmem:[%s242] sm:$0xff]
      %v262 = vld [vmem:[%s242 + $0x8] sm:$0xff]
      %v263 = vld [vmem:[%s2] sm:$0xff]
      %v264 = vld [vmem:[%s2 + $0x8] sm:$0xff]
      %v265 = vld [vmem:[%s2 + $0x10] sm:$0xff]
      %v266 = vld [vmem:[%s2 + $0x18] sm:$0xff]
      %v267 = vld [vmem:[%s2 + $0x20] sm:$0xff]
      %v268 = vld [vmem:[%s2 + $0x28] sm:$0xff]
      %v269 = vld [vmem:[%s2 + $0x30] sm:$0xff]
      %v270 = vld [vmem:[%s2 + $0x38] sm:$0xff]
      %v271 = vld [vmem:[%s2 + $0x40] sm:$0xff]
      %v272 = vld [vmem:[%s2 + $0x48] sm:$0xff]
      %v273 = vld [vmem:[%s2 + $0x50] sm:$0xff]
      %v274 = vld [vmem:[%s2 + $0x58] sm:$0xff]
      %v275 = vld [vmem:[%s2 + $0x60] sm:$0xff]
      %v276 = vld [vmem:[%s2 + $0x68] sm:$0xff]
      %v277 = vld [vmem:[%s2 + $0x70] sm:$0xff]
      %v278 = vld [vmem:[%s2 + $0x78] sm:$0xff]
      %v279 = vld [vmem:[%s2 + $0x80] sm:$0xff]
      %v280 = vld [vmem:[%s2 + $0x88] sm:$0xff]
      %v281 = vld [vmem:[%s2 + $0x90] sm:$0xff]
      %v282 = vld [vmem:[%s2 + $0x98] sm:$0xff]
      %v283 = vld [vmem:[%s2 + $0xa0] sm:$0xff]
      %v284 = vld [vmem:[%s2 + $0xa8] sm:$0xff]
      %v285 = vld [vmem:[%s2 + $0xb0] sm:$0xff]
      %v286 = vld [vmem:[%s2 + $0xb8] sm:$0xff]
      %v287 = vld [vmem:[%s2 + $0xc0] sm:$0xff]
      %v288 = vld [vmem:[%s2 + $0xc8] sm:$0xff]
      %v289 = vld [vmem:[%s2 + $0xd0] sm:$0xff]
      %v290 = vld [vmem:[%s2 + $0xd8] sm:$0xff]
      %v291 = vld [vmem:[%s2 + $0xe0] sm:$0xff]
      %v292 = vld [vmem:[%s2 + $0xe8] sm:$0xff]
      %v293 = vld [vmem:[%s2 + $0xf0] sm:$0xff]
      %v294 = vld [vmem:[%s2 + $0xf8] sm:$0xff]
      %v295 = vld [vmem:[%s2 + $0x100] sm:$0xff]
      %v296 = vld [vmem:[%s2 + $0x108] sm:$0xff]
      %v297 = vld [vmem:[%s2 + $0x110] sm:$0xff]
      %v298 = vld [vmem:[%s2 + $0x118] sm:$0xff]
      %v299 = vld [vmem:[%s2 + $0x120] sm:$0xff]
      %v300 = vld [vmem:[%s2 + $0x128] sm:$0xff]
      %v301 = vld [vmem:[%s2 + $0x130] sm:$0xff]
      %v302 = vld [vmem:[%s2 + $0x138] sm:$0xff]
      %v303 = vld [vmem:[%s2 + $0x140] sm:$0xff]
      %v304 = vld [vmem:[%s2 + $0x148] sm:$0xff]
      %v305 = vld [vmem:[%s2 + $0x150] sm:$0xff]
      %v306 = vld [vmem:[%s2 + $0x158] sm:$0xff]
      %v307 = vld [vmem:[%s2 + $0x160] sm:$0xff]
      %v308 = vld [vmem:[%s2 + $0x168] sm:$0xff]
      %v309 = vld [vmem:[%s2 + $0x170] sm:$0xff]
      %v310 = vld [vmem:[%s2 + $0x178] sm:$0xff]
      %v311 = vld [vmem:[%s2 + $0x180] sm:$0xff]
      %v312 = vld [vmem:[%s2 + $0x188] sm:$0xff]
      %v313 = vld [vmem:[%s2 + $0x190] sm:$0xff]
      %v314 = vld [vmem:[%s2 + $0x198] sm:$0xff]
      %v315 = vld [vmem:[%s2 + $0x1a0] sm:$0xff]
      %v316 = vld [vmem:[%s2 + $0x1a8] sm:$0xff]
      %v317 = vld [vmem:[%s2 + $0x1b0] sm:$0xff]
      %v318 = vld [vmem:[%s2 + $0x1b8] sm:$0xff]
      %v319 = vld [vmem:[%s2 + $0x1c0] sm:$0xff]
      %v320 = vld [vmem:[%s2 + $0x1c8] sm:$0xff]
      %v321 = vld [vmem:[%s2 + $0x1d0] sm:$0xff]
      %v322 = vld [vmem:[%s2 + $0x1d8] sm:$0xff]
      %v323 = vld [vmem:[%s2 + $0x1e0] sm:$0xff]
      %v324 = vld [vmem:[%s2 + $0x1e8] sm:$0xff]
      %v325 = vld [vmem:[%s2 + $0x1f0] sm:$0xff]
      %v326 = vld [vmem:[%s2 + $0x1f8] sm:$0xff]
      %327 = vmatprep.subr.mxu0 %v294
      %328 = vmatpush1.msra.mxu0 %v293
      %329 = vmatprep.subr.mxu0 %v292
      %330 = vmatpush1.msra.mxu0 %v291
      %331 = vmatprep.subr.mxu0 %v290
      %332 = vmatpush1.msra.mxu0 %v289
      %333 = vmatprep.subr.mxu0 %v288
      %334 = vmatpush1.msra.mxu0 %v287
      %335 = vmatprep.subr.mxu0 %v286
      %336 = vmatpush1.msra.mxu0 %v285
      %337 = vmatprep.subr.mxu0 %v284
      %338 = vmatpush1.msra.mxu0 %v283
      %339 = vmatprep.subr.mxu0 %v282
      %340 = vmatpush1.msra.mxu0 %v281
      %341 = vmatprep.subr.mxu0 %v280
      %342 = vmatpush1.msra.mxu0 %v279
      %343 = vmatprep.subr.mxu0 %v278
      %344 = vmatpush1.msra.mxu0 %v277
      %345 = vmatprep.subr.mxu0 %v276
      %346 = vmatpush1.msra.mxu0 %v275
      %347 = vmatprep.subr.mxu0 %v274
      %348 = vmatpush1.msra.mxu0 %v273
      %349 = vmatprep.subr.mxu0 %v272
      %350 = vmatpush1.msra.mxu0 %v271
      %351 = vmatprep.subr.mxu0 %v270
      %352 = vmatpush1.msra.mxu0 %v269
      %353 = vmatprep.subr.mxu0 %v268
      %354 = vmatpush1.msra.mxu0 %v267
      %355 = vmatprep.subr.mxu0 %v266
      %356 = vmatpush1.msra.mxu0 %v265
      %357 = vmatprep.subr.mxu0 %v264
      %358 = vmatpush1.msra.mxu0 %v263
      %359 = vmatprep.subr.mxu0 %v326
      %360 = vmatpush2.msra.mxu0 %v325
      %361 = vmatprep.subr.mxu0 %v324
      %362 = vmatpush2.msra.mxu0 %v323
      %363 = vmatprep.subr.mxu0 %v322
      %364 = vmatpush2.msra.mxu0 %v321
      %365 = vmatprep.subr.mxu0 %v320
      %366 = vmatpush2.msra.mxu0 %v319
      %367 = vmatprep.subr.mxu0 %v318
      %368 = vmatpush2.msra.mxu0 %v317
      %369 = vmatprep.subr.mxu0 %v316
      %370 = vmatpush2.msra.mxu0 %v315
      %371 = vmatprep.subr.mxu0 %v314
      %372 = vmatpush2.msra.mxu0 %v313
      %373 = vmatprep.subr.mxu0 %v312
      %374 = vmatpush2.msra.mxu0 %v311
      %375 = vmatprep.subr.mxu0 %v310
      %376 = vmatpush2.msra.mxu0 %v309
      %377 = vmatprep.subr.mxu0 %v308
      %378 = vmatpush2.msra.mxu0 %v307
      %379 = vmatprep.subr.mxu0 %v306
      %380 = vmatpush2.msra.mxu0 %v305
      %381 = vmatprep.subr.mxu0 %v304
      %382 = vmatpush2.msra.mxu0 %v303
      %383 = vmatprep.subr.mxu0 %v302
      %384 = vmatpush2.msra.mxu0 %v301
      %385 = vmatprep.subr.mxu0 %v300
      %386 = vmatpush2.msra.mxu0 %v299
      %387 = vmatprep.subr.mxu0 %v298
      %388 = vmatpush2.msra.mxu0 %v297
      %389 = vmatprep.subr.mxu0 %v296
      %390 = vmatpush2.msra.mxu0 %v295
      %391 = vmatprep.mubr.f32.mxu0 %v262
      %392 = vmatmul.mubr.f32.gmra.mxu0 %v261
      %v393 = vpop.f32.mrf.mxu0
      %v394 = vadd.f32 0.0, %v393
      %v395 = vpop.f32.mrf.mxu0
      %v396 = vadd.f32 0.0, %v395
      %397 = vdwg.mxu0
      %v398 = vld [vmem:[#allocation2] sm:$0xff]
      %v399 = vld [vmem:[%s3] sm:$0xff]
      %v400 = vld [vmem:[%s3 + $0x8] sm:$0xff]
      %vm401 = vcmask 64512
      %v403 = vsel %vm401, %v398, 0
      %405 = vmatprep.subr.mxu0 0.0
      %406 = vmatpush1.msra.mxu0 0.0
      %407 = vmatprep.subr.mxu0 0.0
      %408 = vmatpush1.msra.mxu0 0.0
      %409 = vmatprep.subr.mxu0 0.0
      %410 = vmatpush1.msra.mxu0 0.0
      %411 = vmatprep.subr.mxu0 0.0
      %412 = vmatpush1.msra.mxu0 0.0
      %413 = vmatprep.subr.mxu0 0.0
      %414 = vmatpush1.msra.mxu0 0.0
      %415 = vmatprep.subr.mxu0 0.0
      %416 = vmatpush1.msra.mxu0 0.0
      %417 = vmatprep.subr.mxu0 0.0
      %418 = vmatpush1.msra.mxu0 0.0
      %419 = vmatprep.subr.mxu0 0.0
      %420 = vmatpush1.msra.mxu0 0.0
      %421 = vmatprep.subr.mxu0 0.0
      %422 = vmatpush1.msra.mxu0 0.0
      %423 = vmatprep.subr.mxu0 0.0
      %424 = vmatpush1.msra.mxu0 0.0
      %425 = vmatprep.subr.mxu0 0.0
      %426 = vmatpush1.msra.mxu0 0.0
      %427 = vmatprep.subr.mxu0 0.0
      %428 = vmatpush1.msra.mxu0 0.0
      %429 = vmatprep.subr.mxu0 0.0
      %430 = vmatpush1.msra.mxu0 0.0
      %431 = vmatprep.subr.mxu0 0.0
      %432 = vmatpush1.msra.mxu0 0.0
      %433 = vmatprep.subr.mxu0 0.0
      %434 = vmatpush1.msra.mxu0 0.0
      %435 = vmatprep.subr.mxu0 %v400
      %436 = vmatpush1.msra.mxu0 %v399
      %437 = vmatprep.subr.mxu0 0.0
      %438 = vmatpush2.msra.mxu0 0.0
      %439 = vmatprep.subr.mxu0 0.0
      %440 = vmatpush2.msra.mxu0 0.0
      %441 = vmatprep.subr.mxu0 0.0
      %442 = vmatpush2.msra.mxu0 0.0
      %443 = vmatprep.subr.mxu0 0.0
      %444 = vmatpush2.msra.mxu0 0.0
      %445 = vmatprep.subr.mxu0 0.0
      %446 = vmatpush2.msra.mxu0 0.0
      %447 = vmatprep.subr.mxu0 0.0
      %448 = vmatpush2.msra.mxu0 0.0
      %449 = vmatprep.subr.mxu0 0.0
      %450 = vmatpush2.msra.mxu0 0.0
      %451 = vmatprep.subr.mxu0 0.0
      %452 = vmatpush2.msra.mxu0 0.0
      %453 = vmatprep.subr.mxu0 0.0
      %454 = vmatpush2.msra.mxu0 0.0
      %455 = vmatprep.subr.mxu0 0.0
      %456 = vmatpush2.msra.mxu0 0.0
      %457 = vmatprep.subr.mxu0 0.0
      %458 = vmatpush2.msra.mxu0 0.0
      %459 = vmatprep.subr.mxu0 0.0
      %460 = vmatpush2.msra.mxu0 0.0
      %461 = vmatprep.subr.mxu0 0.0
      %462 = vmatpush2.msra.mxu0 0.0
      %463 = vmatprep.subr.mxu0 0.0
      %464 = vmatpush2.msra.mxu0 0.0
      %465 = vmatprep.subr.mxu0 0.0
      %466 = vmatpush2.msra.mxu0 0.0
      %467 = vmatprep.subr.mxu0 0.0
      %468 = vmatpush2.msra.mxu0 0.0
      %469 = vmatprep.mubr.f32.mxu0 0.0
      %470 = vmatmul.mubr.f32.gmra.mxu0 %v403
      %v471 = vpop.f32.mrf.mxu0
      %v472 = vadd.f32 %v394, %v471
      %v473 = vpop.f32.mrf.mxu0
      %v474 = vadd.f32 %v396, %v473
      %475 = vdwg.mxu0
      %476 = vst [vmem:[%s252] sm:$0xff] %v472
      %477 = vst [vmem:[%s252 + $0x8] sm:$0xff] %v474
      %479 = vrot.lane.b32.xlu0 %v474, 8
      %v480 = vpop.permute.xlu0 %479
      %482 = vst.msk [vmem:[#allocation2] sm:$0xff] %vm401, %v480
      %s483 = smul.u32 2, %s20
      %p484 = scmp.lt.s32.totalorder %s19, 0
      %s485 = scalar_select %p484, %s19, 0
      %p486 = scmp.lt.s32.totalorder %s483, 15
      %s487 = scalar_select %p486, %s483, 15
      %s488 = smul.addr %s485, 16
      %s489 = sadd.s32 %s487, %s488
      %s490 = smul.addr %s489, 8
      %s491 = scalar_lea.vmem %s4, %s490
      // Predicated region
      $region41: #{pann_forward.1} parent=35 // pred_check
        %p492 = pneg %p143
      $region42: #{pann_forward.1} parent=35 // pred_check_branch
        %494 = sbr.rel (%p492) target = $region44
      $region43: #{pann_forward.1} parent=35 // pred_region
        %s495 = smul.u32 2, %s20
      $region44: #{pann_forward.1} parent=35 // pred_fallthru
        _
    $region36: #{pann_forward.1} parent=5 // pred_fallthru
      _
    %p496 = scmp.le.s32.totalorder 2, %s10
    // Predicated region
    $region45: #{pann_forward.1} parent=5 // pred_check
      %p497 = pneg %p496
    $region46: #{pann_forward.1} parent=5 // pred_check_branch
      %499 = sbr.rel (%p497) target = $region48
    $region47: #{pann_forward.1} parent=5 // pred_region
      %s500 = ssub.s32 %s10, 2
      // Predicated region
      $region49: #{pann_forward.1} parent=47 // pred_check
        %p501 = pneg %p149
      $region50: #{pann_forward.1} parent=47 // pred_check_branch
        %503 = sbr.rel (%p501) target = $region52
      $region51: #{pann_forward.1} parent=47 // pred_region
        %s504 = smul.u32 2, %s22
        %p505 = scmp.lt.s32.totalorder %s21, 0
        %s506 = scalar_select %p505, %s21, 0
        %p507 = scmp.lt.s32.totalorder %s504, 15
        %s508 = scalar_select %p507, %s504, 15
        %s509 = smul.addr %s506, 16
        %s510 = sadd.s32 %s508, %s509
        %s511 = smul.addr %s510, 8
        %s512 = scalar_lea.vmem %s4, %s511
      $region52: #{pann_forward.1} parent=47 // pred_fallthru
        _
    $region48: #{pann_forward.1} parent=5 // pred_fallthru
      _
  $region6: #{pann_forward.1} parent=0 // loop_footer
    %s14 = sadd.s32 1, %s10
  $region7: #{pann_forward.1} parent=0 // loop_footer_branch
    %9 = sbr.rel target = $region3
  $region8: #{pann_forward.1} parent=0 // loop_exit
    _

</llo_original>
